<compile_context>
chip_gen: v6e
topology: v6e:2x2x1
jax: 0.10.0
libtpu: 0.0.40
codegen_flags: <defaults>
</compile_context>

<pallas_src>
import jax
import jax.numpy as jnp
from jax.experimental import pallas as pl
from jax.experimental.pallas import tpu as pltpu

LN_EPS = 1e-5          # nn.LayerNorm default
LANE = 128             # lane width (hidden-dim padding multiple)
SUBLANE = 8            # f32 sublane multiple for the row tile
TILE_N_MAX = 2048      # upper bound on the row tile (amortizes grid-step overhead)


def _round_up(n, m):
    return ((n + m - 1) // m) * m


def _projection_kernel(x_ref, gamma_ref, beta_ref, w1_ref, b1_ref, w2_ref, b2_ref,
                       o_ref):
    # ---- LayerNorm over the true feature dim (no padding -> no mask needed) ----
    x = x_ref[...].astype(jnp.float32)                          # (tile_n, d_in)
    mean = jnp.mean(x, axis=-1, keepdims=True)
    centered = x - mean
    var = jnp.mean(centered * centered, axis=-1, keepdims=True)
    xn = centered * jax.lax.rsqrt(var + LN_EPS)
    xn = xn * gamma_ref[...] + beta_ref[...]                    # (1, d_in) broadcast

    # ---- Linear 1: (tile_n, d_in) @ (d_in, d_hid_p); padded cols are exactly 0 ----
    h = jnp.dot(xn, w1_ref[...], preferred_element_type=jnp.float32) + b1_ref[...]

    # ---- GELU (exact erf form == torch nn.GELU default); GELU(0) == 0 keeps pads 0 ----
    h = 0.5 * h * (1.0 + jax.lax.erf(h * 0.7071067811865476))

    # ---- Linear 2: (tile_n, d_hid_p) @ (d_hid_p, d_out); padded w2 rows are 0 ----
    y = jnp.dot(h, w2_ref[...], preferred_element_type=jnp.float32) + b2_ref[...]

    o_ref[...] = y.astype(o_ref.dtype)


def prepare_params(gamma, beta, w1, b1, w2, b2):
    """One-time cast + hidden-dim padding (done once, hoisted out of the call path).

    w1: (d_in, d_out), w2: (d_out, d_out) -- (in, out) layout, i.e. torch weight.T.
    Only the hidden dim (VMEM-resident activation) is padded; d_in / final d_out stay
    at their true sizes so no HBM bytes are spent on padding.
    """
    d_in, d_out = w1.shape
    d_hid_p = _round_up(d_out, LANE)
    f32 = jnp.float32
    gamma_p = gamma.astype(f32).reshape(1, d_in)
    beta_p = beta.astype(f32).reshape(1, d_in)
    w1_p = jnp.zeros((d_in, d_hid_p), f32).at[:, :d_out].set(w1.astype(f32))
    b1_p = jnp.zeros((1, d_hid_p), f32).at[0, :d_out].set(b1.astype(f32))
    w2_p = jnp.zeros((d_hid_p, d_out), f32).at[:d_out, :].set(w2.astype(f32))
    b2_p = b2.astype(f32).reshape(1, d_out)
    meta = (d_in, d_out, d_hid_p)
    return meta, (gamma_p, beta_p, w1_p, b1_p, w2_p, b2_p)


def _choose_tile_and_vmem(n, d_in, d_hid_p, d_out, x_itemsize, o_itemsize):
    """Generation-aware row-tile and VMEM-limit selection."""
    try:
        vmem_cap = int(pltpu.get_tpu_info().vmem_capacity_bytes)
    except Exception:
        vmem_cap = 64 * 1024 * 1024          # conservative per-core default (v7x)

    # Resident (single-buffered) parameter bytes.
    resident = 4 * (2 * d_in + d_in * d_hid_p + d_hid_p + d_hid_p * d_out + d_out)
    # Streamed per-row bytes: double-buffered x / out tiles + f32 intermediates.
    per_row = (2 * (d_in * x_itemsize + d_out * o_itemsize)
               + 4 * (d_in + 2 * d_hid_p + d_out))

    budget = int(0.75 * vmem_cap) - resident - (4 << 20)        # leave headroom
    tile_n = max(SUBLANE, (budget // max(per_row, 1)) // SUBLANE * SUBLANE)
    tile_n = min(tile_n, TILE_N_MAX)
    # Keep >= 2 grid steps when N allows, so both v7x TensorCores get work.
    if pl.cdiv(n, tile_n) < 2 and n > SUBLANE:
        tile_n = _round_up(pl.cdiv(n, 2), SUBLANE)
    tile_n = min(tile_n, _round_up(n, SUBLANE))

    # Request only what the buffers need (+ headroom), never the full physical VMEM.
    vmem_limit = min(vmem_cap,
                     max(resident + tile_n * per_row + (8 << 20), 32 << 20))
    return tile_n, int(vmem_limit), resident


def projection_block(x, meta, params):
    """x: (..., d_in). Returns (..., d_out)."""
    d_in, d_out, d_hid_p = meta
    gamma_p, beta_p, w1_p, b1_p, w2_p, b2_p = params
    assert x.shape[-1] == d_in

    lead = x.shape[:-1]
    n = 1
    for s in lead:
        n *= s

    out_dtype = x.dtype
    x2 = x.reshape(n, d_in)                      # free: no pad / astype HBM pass

    tile_n, vmem_limit, resident_bytes = _choose_tile_and_vmem(
        n, d_in, d_hid_p, d_out, x2.dtype.itemsize, jnp.dtype(out_dtype).itemsize)
    grid = (pl.cdiv(n, tile_n),)                 # boundary tile handled by Pallas

    def resident(shape):
        # Constant index_map + single buffer: lives in VMEM across all grid steps.
        return pl.BlockSpec(shape, lambda i: (0, 0), pipeline_mode=pl.Buffered(1))

    cost = pl.CostEstimate(
        flops=2 * n * (d_in * d_hid_p + d_hid_p * d_out) + 10 * n * d_in,
        transcendentals=n * (d_hid_p + 1),
        bytes_accessed=(n * d_in * x2.dtype.itemsize
                        + n * d_out * jnp.dtype(out_dtype).itemsize
                        + resident_bytes),
    )

    out = pl.pallas_call(
        _projection_kernel,
        out_shape=jax.ShapeDtypeStruct((n, d_out), out_dtype),
        grid=grid,
        in_specs=[
            pl.BlockSpec((tile_n, d_in), lambda i: (i, 0)),   # streamed rows, native dtype
            resident((1, d_in)),            # gamma
            resident((1, d_in)),            # beta
            resident((d_in, d_hid_p)),      # w1 (hidden dim padded to 128 multiple)
            resident((1, d_hid_p)),         # b1
            resident((d_hid_p, d_out)),     # w2 (padded rows are zero)
            resident((1, d_out)),           # b2
        ],
        out_specs=pl.BlockSpec((tile_n, d_out), lambda i: (i, 0)),
        compiler_params=pltpu.CompilerParams(
            dimension_semantics=("parallel",),  # shard rows across v7x's 2 TCs
            vmem_limit_bytes=vmem_limit,
        ),
        cost_estimate=cost,
    )(x2, gamma_p, beta_p, w1_p, b1_p, w2_p, b2_p)

    return out.reshape(*lead, d_out)


def reference(x, gamma, beta, w1, b1, w2, b2):
    mean = jnp.mean(x, axis=-1, keepdims=True)
    var = jnp.mean((x - mean) ** 2, axis=-1, keepdims=True)
    xn = (x - mean) / jnp.sqrt(var + LN_EPS) * gamma + beta
    h = xn @ w1 + b1
    h = jax.nn.gelu(h, approximate=False)
    return h @ w2 + b2


if __name__ == "__main__":
    batch, seq, input_dim, output_dim = 2, 8, 32, 64

    key = jax.random.PRNGKey(0)
    kx, kg, kb, kw1, kb1, kw2, kb2 = jax.random.split(key, 7)

    x = jax.random.normal(kx, (batch, seq, input_dim), dtype=jnp.float32)

    # Deterministic synthetic parameters (shapes match the torch module).
    gamma = 1.0 + 0.1 * jax.random.normal(kg, (input_dim,), jnp.float32)
    beta = 0.1 * jax.random.normal(kb, (input_dim,), jnp.float32)
    # torch Linear stores weight as (out, in); the kernel takes (in, out) == weight.T.
    w1 = jax.random.normal(kw1, (input_dim, output_dim), jnp.float32) * 0.05
    b1 = jax.random.normal(kb1, (output_dim,), jnp.float32) * 0.05
    w2 = jax.random.normal(kw2, (output_dim, output_dim), jnp.float32) * 0.05
    b2 = jax.random.normal(kb2, (output_dim,), jnp.float32) * 0.05

    meta, params = prepare_params(gamma, beta, w1, b1, w2, b2)  # hoisted, done once
    y = projection_block(x, meta, params)
    y = jax.block_until_ready(y)

    y_ref = reference(x, gamma, beta, w1, b1, w2, b2)
    assert y.shape == (batch, seq, output_dim)
    assert jnp.allclose(y, y_ref, atol=1e-4, rtol=1e-4), "mismatch vs reference"

    print("KERNEL_OK")
</pallas_src>

<mosaic_0001>
module attributes {stable_mosaic.version = 11 : i64} {
  func.func @_projection_kernel(%arg0: i32, %arg1: memref<8x32xf32, #tpu.memory_space<vmem>>, %arg2: memref<1x32xf32, #tpu.memory_space<vmem>>, %arg3: memref<1x32xf32, #tpu.memory_space<vmem>>, %arg4: memref<32x128xf32, #tpu.memory_space<vmem>>, %arg5: memref<1x128xf32, #tpu.memory_space<vmem>>, %arg6: memref<128x64xf32, #tpu.memory_space<vmem>>, %arg7: memref<1x64xf32, #tpu.memory_space<vmem>>, %arg8: memref<8x64xf32, #tpu.memory_space<vmem>>) attributes {dimension_semantics = [#tpu.dimension_semantics<parallel>], iteration_bounds = array<i64: 2>, scalar_prefetch = 0 : i64, scratch_operands = 0 : i64, tpu.core_type = #tpu.core_type<tc>, window_params = [{transform_indices = @transform_0, window_bounds = array<i64: 8, 32>}, {pipeline_mode = #tpu.pipeline_mode<synchronous>, transform_indices = @transform_1, window_bounds = array<i64: 1, 32>}, {pipeline_mode = #tpu.pipeline_mode<synchronous>, transform_indices = @transform_2, window_bounds = array<i64: 1, 32>}, {pipeline_mode = #tpu.pipeline_mode<synchronous>, transform_indices = @transform_3, window_bounds = array<i64: 32, 128>}, {pipeline_mode = #tpu.pipeline_mode<synchronous>, transform_indices = @transform_4, window_bounds = array<i64: 1, 128>}, {pipeline_mode = #tpu.pipeline_mode<synchronous>, transform_indices = @transform_5, window_bounds = array<i64: 128, 64>}, {pipeline_mode = #tpu.pipeline_mode<synchronous>, transform_indices = @transform_6, window_bounds = array<i64: 1, 64>}, {transform_indices = @transform_7, window_bounds = array<i64: 8, 64>}]} {
    %c0 = arith.constant 0 : index
    %c0_0 = arith.constant 0 : index
    %0 = vector.load %arg1[%c0, %c0_0] : memref<8x32xf32, #tpu.memory_space<vmem>>, vector<8x32xf32>
    %cst = arith.constant dense<0.000000e+00> : vector<8xf32>
    %1 = vector.multi_reduction <add>, %0, %cst [1] : vector<8x32xf32> to vector<8xf32>
    %2 = vector.shape_cast %1 : vector<8xf32> to vector<8x1xf32>
    %cst_1 = arith.constant 3.200000e+01 : f32
    %3 = vector.broadcast %cst_1 : f32 to vector<8x1xf32>
    %4 = arith.divf %2, %3 : vector<8x1xf32>
    %5 = vector.broadcast %4 : vector<8x1xf32> to vector<8x32xf32>
    %6 = arith.subf %0, %5 : vector<8x32xf32>
    %7 = arith.mulf %6, %6 : vector<8x32xf32>
    %cst_2 = arith.constant dense<0.000000e+00> : vector<8xf32>
    %8 = vector.multi_reduction <add>, %7, %cst_2 [1] : vector<8x32xf32> to vector<8xf32>
    %9 = vector.shape_cast %8 : vector<8xf32> to vector<8x1xf32>
    %cst_3 = arith.constant 3.200000e+01 : f32
    %10 = vector.broadcast %cst_3 : f32 to vector<8x1xf32>
    %11 = arith.divf %9, %10 : vector<8x1xf32>
    %cst_4 = arith.constant 9.99999974E-6 : f32
    %12 = vector.broadcast %cst_4 : f32 to vector<8x1xf32>
    %13 = arith.addf %11, %12 : vector<8x1xf32>
    %14 = math.rsqrt %13 : vector<8x1xf32>
    %15 = vector.broadcast %14 : vector<8x1xf32> to vector<8x32xf32>
    %16 = arith.mulf %6, %15 : vector<8x32xf32>
    %c0_5 = arith.constant 0 : index
    %c0_6 = arith.constant 0 : index
    %17 = vector.load %arg2[%c0_5, %c0_6] : memref<1x32xf32, #tpu.memory_space<vmem>>, vector<1x32xf32>
    %18 = vector.broadcast %17 : vector<1x32xf32> to vector<8x32xf32>
    %19 = arith.mulf %16, %18 : vector<8x32xf32>
    %c0_7 = arith.constant 0 : index
    %c0_8 = arith.constant 0 : index
    %20 = vector.load %arg3[%c0_7, %c0_8] : memref<1x32xf32, #tpu.memory_space<vmem>>, vector<1x32xf32>
    %21 = vector.broadcast %20 : vector<1x32xf32> to vector<8x32xf32>
    %22 = arith.addf %19, %21 : vector<8x32xf32>
    %c0_9 = arith.constant 0 : index
    %c0_10 = arith.constant 0 : index
    %23 = vector.load %arg4[%c0_9, %c0_10] : memref<32x128xf32, #tpu.memory_space<vmem>>, vector<32x128xf32>
    %cst_11 = arith.constant dense<0.000000e+00> : vector<8x128xf32>
    %24 = tpu.matmul %22, %23, %cst_11 {dimension_numbers = #tpu.dot_dimension_numbers<[1], [0], [0], [1], [0, 0, 1, 1], [], []>} : vector<8x32xf32>, vector<32x128xf32>, vector<8x128xf32> -> vector<8x128xf32>
    %c0_12 = arith.constant 0 : index
    %c0_13 = arith.constant 0 : index
    %25 = vector.load %arg5[%c0_12, %c0_13] : memref<1x128xf32, #tpu.memory_space<vmem>>, vector<1x128xf32>
    %26 = vector.broadcast %25 : vector<1x128xf32> to vector<8x128xf32>
    %27 = arith.addf %24, %26 : vector<8x128xf32>
    %cst_14 = arith.constant 5.000000e-01 : f32
    %28 = vector.broadcast %cst_14 : f32 to vector<8x128xf32>
    %29 = arith.mulf %28, %27 : vector<8x128xf32>
    %cst_15 = arith.constant 0.707106769 : f32
    %30 = vector.broadcast %cst_15 : f32 to vector<8x128xf32>
    %31 = arith.mulf %27, %30 : vector<8x128xf32>
    %32 = math.erf %31 : vector<8x128xf32>
    %cst_16 = arith.constant 1.000000e+00 : f32
    %33 = vector.broadcast %cst_16 : f32 to vector<8x128xf32>
    %34 = arith.addf %33, %32 : vector<8x128xf32>
    %35 = arith.mulf %29, %34 : vector<8x128xf32>
    %c0_17 = arith.constant 0 : index
    %c0_18 = arith.constant 0 : index
    %36 = vector.load %arg6[%c0_17, %c0_18] : memref<128x64xf32, #tpu.memory_space<vmem>>, vector<128x64xf32>
    %cst_19 = arith.constant dense<0.000000e+00> : vector<8x64xf32>
    %37 = tpu.matmul %35, %36, %cst_19 {dimension_numbers = #tpu.dot_dimension_numbers<[1], [0], [0], [1], [0, 0, 1, 1], [], []>} : vector<8x128xf32>, vector<128x64xf32>, vector<8x64xf32> -> vector<8x64xf32>
    %c0_20 = arith.constant 0 : index
    %c0_21 = arith.constant 0 : index
    %38 = vector.load %arg7[%c0_20, %c0_21] : memref<1x64xf32, #tpu.memory_space<vmem>>, vector<1x64xf32>
    %39 = vector.broadcast %38 : vector<1x64xf32> to vector<8x64xf32>
    %40 = arith.addf %37, %39 : vector<8x64xf32>
    %c0_22 = arith.constant 0 : index
    %c0_23 = arith.constant 0 : index
    %41 = vector.load %arg8[%c0_22, %c0_23] : memref<8x64xf32, #tpu.memory_space<vmem>>, vector<8x64xf32>
    tpu.vector_store %arg8[%c0_22, %c0_23], %40 {strides = array<i32>} : memref<8x64xf32, #tpu.memory_space<vmem>>, vector<8x64xf32>,
    return
  }
  func.func @transform_0(%arg0: i32) -> (i32, i32) {
    %c0_i32 = arith.constant 0 : i32
    %c0_i32_0 = arith.constant 0 : i32
    return %arg0, %c0_i32 : i32, i32
  }
  func.func @transform_1(%arg0: i32) -> (i32, i32) {
    %c0_i32 = arith.constant 0 : i32
    %c0_i32_0 = arith.constant 0 : i32
    %c0_i32_1 = arith.constant 0 : i32
    return %c0_i32, %c0_i32_0 : i32, i32
  }
  func.func @transform_2(%arg0: i32) -> (i32, i32) {
    %c0_i32 = arith.constant 0 : i32
    %c0_i32_0 = arith.constant 0 : i32
    %c0_i32_1 = arith.constant 0 : i32
    return %c0_i32, %c0_i32_0 : i32, i32
  }
  func.func @transform_3(%arg0: i32) -> (i32, i32) {
    %c0_i32 = arith.constant 0 : i32
    %c0_i32_0 = arith.constant 0 : i32
    %c0_i32_1 = arith.constant 0 : i32
    return %c0_i32, %c0_i32_0 : i32, i32
  }
  func.func @transform_4(%arg0: i32) -> (i32, i32) {
    %c0_i32 = arith.constant 0 : i32
    %c0_i32_0 = arith.constant 0 : i32
    %c0_i32_1 = arith.constant 0 : i32
    return %c0_i32, %c0_i32_0 : i32, i32
  }
  func.func @transform_5(%arg0: i32) -> (i32, i32) {
    %c0_i32 = arith.constant 0 : i32
    %c0_i32_0 = arith.constant 0 : i32
    %c0_i32_1 = arith.constant 0 : i32
    return %c0_i32, %c0_i32_0 : i32, i32
  }
  func.func @transform_6(%arg0: i32) -> (i32, i32) {
    %c0_i32 = arith.constant 0 : i32
    %c0_i32_0 = arith.constant 0 : i32
    %c0_i32_1 = arith.constant 0 : i32
    return %c0_i32, %c0_i32_0 : i32, i32
  }
  func.func @transform_7(%arg0: i32) -> (i32, i32) {
    %c0_i32 = arith.constant 0 : i32
    %c0_i32_0 = arith.constant 0 : i32
    return %arg0, %c0_i32 : i32, i32
  }
}

</mosaic_0001>

<llo_original>
// kernel: tpu_custom_call.1
$region0: #{tpu_custom_call.1}
  #allocation0 [shape = 'u32[]', space=smem, size = 0x4, offset = 0x4, fixed_abs, tag = 'smem constant byte address 0x4 - core index']
  #allocation1 [shape = 'u32[144,128]{1,0:T(1,128)}', space=vmem, size = 0x12000, scoped, tag = 'internal scratch']
  %s0 = inlined_call_operand.vmem [shape: f32[16,32], index: 0, kind: input, shape index: {}]
  %s1 = inlined_call_operand.vmem [shape: f32[1,32], index: 1, kind: input, shape index: {}]
  %s2 = inlined_call_operand.vmem [shape: f32[1,32], index: 2, kind: input, shape index: {}]
  %s3 = inlined_call_operand.vmem [shape: f32[32,128], index: 3, kind: input, shape index: {}]
  %s4 = inlined_call_operand.vmem [shape: f32[1,128], index: 4, kind: input, shape index: {}]
  %s5 = inlined_call_operand.vmem [shape: f32[128,64], index: 5, kind: input, shape index: {}]
  %s6 = inlined_call_operand.vmem [shape: f32[1,64], index: 6, kind: input, shape index: {}]
  %s7 = inlined_call_operand.hbm [shape: f32[16,64], index: 7, kind: output, shape index: {}]
  %s8 = sld [smem:[#allocation0]]
  $region61: #{tpu_custom_call.1} parent=0
    _
  %s10 = ssub.s32 1, %s8
  %s11 = scalar_select 0, %s10, %s8
  $region1: #{tpu_custom_call.1} parent=0
    #allocation2 [shape = 'u8[8192]{0}', space=vmem, size = 0x2000, scoped, tag = 'output window, operand 0']
    #allocation3 [shape = 's32[2]{0}', space=sflag, size = 0x8, scoped, tag = 'scoped memory for tpu_custom_call.1']
    %12 = vsyncpa [#allocation3], 0
    %s13 = scalar_lea.sflag [#allocation3], 1
    %14 = vsyncpa %s13, 0
    loop: start=0, step=1, limit=4
    $region2: #{tpu_custom_call.1} parent=1 // loop_pre_header
      _
    $region3: #{tpu_custom_call.1} parent=1 // loop_header
      %s16 = sphi 0, %s20
      %p17 = scmp.ge.s32.totalorder %s16, 4
      %s26 = sphi 0, %s28
      %s29 = sphi 0, %s26
      %s30 = sphi 0, %s29
      %s46 = sphi 0, %s30
      %s50 = sphi 0, %s50
      %s52 = sphi 0, %s50
      %s53 = sphi 0, %s52
      %s67 = sphi 0, %s53
      %s71 = sphi 0, %s71
      %s73 = sphi 0, %s71
      %s74 = sphi 0, %s73
      %s88 = sphi 0, %s74
      %s92 = sphi 0, %s92
      %s94 = sphi 0, %s92
      %s95 = sphi 0, %s94
      %s109 = sphi 0, %s95
      %s113 = sphi 0, %s113
      %s115 = sphi 0, %s113
      %s116 = sphi 0, %s115
      %s130 = sphi 0, %s116
      %s134 = sphi 0, %s134
      %s136 = sphi 0, %s134
      %s137 = sphi 0, %s136
      %s151 = sphi 0, %s137
      %s155 = sphi 0, %s155
      %s157 = sphi 0, %s155
      %s158 = sphi 0, %s157
      %s172 = sphi 0, %s158
      %s178 = sphi 0, %s180
      %s181 = sphi 0, %s178
      %s182 = sphi 0, %s181
      %s198 = sphi 0, %s182
    $region4: #{tpu_custom_call.1} parent=1 // loop_header_branch
      %19 = sbr.rel (%p17) target = $region8
    $region5: #{tpu_custom_call.1} parent=1 // loop_body
      %s21 = ssub.s32 %s16, 1
      %s22 = ssub.s32 %s16, 2
      %s23 = sadd.s32 %s16, 1
      %s24 = ssub.s32 %s16, %s23
      %p25 = scmp.eq.s32.totalorder %s24, 0
      %s27 = sadd.s32 %s26, 1
      %s28 = scalar_select %p25, %s26, %s27
      %p31 = pneg %p25
      %p32 = scmp.eq.s32.totalorder %s16, 1
      %p33 = por %p31, %p32
      %p34 = scmp.ne.s32.totalorder %s26, %s29
      %p35 = scmp.eq.s32.totalorder %s16, 0
      %p36 = por %p34, %p35
      %p37 = scmp.ne.s32.totalorder %s26, %s29
      %p38 = scmp.eq.s32.totalorder %s21, 1
      %p39 = por %p37, %p38
      %p40 = scmp.ne.s32.totalorder %s29, %s30
      %p41 = scmp.eq.s32.totalorder %s21, 0
      %p42 = por %p40, %p41
      %p43 = scmp.ne.s32.totalorder %s29, %s30
      %p44 = scmp.eq.s32.totalorder %s22, 1
      %p45 = por %p43, %p44
      %p47 = scmp.ne.s32.totalorder %s30, %s46
      %p48 = scmp.eq.s32.totalorder %s22, 0
      %p49 = por %p47, %p48
      %s51 = sadd.s32 %s50, 1
      %p54 = scmp.eq.s32.totalorder %s16, 1
      %p55 = scmp.ne.s32.totalorder %s50, %s52
      %p56 = scmp.eq.s32.totalorder %s16, 0
      %p57 = por %p55, %p56
      %p58 = scmp.ne.s32.totalorder %s50, %s52
      %p59 = scmp.eq.s32.totalorder %s21, 1
      %p60 = por %p58, %p59
      %p61 = scmp.ne.s32.totalorder %s52, %s53
      %p62 = scmp.eq.s32.totalorder %s21, 0
      %p63 = por %p61, %p62
      %p64 = scmp.ne.s32.totalorder %s52, %s53
      %p65 = scmp.eq.s32.totalorder %s22, 1
      %p66 = por %p64, %p65
      %p68 = scmp.ne.s32.totalorder %s53, %s67
      %p69 = scmp.eq.s32.totalorder %s22, 0
      %p70 = por %p68, %p69
      %s72 = sadd.s32 %s71, 1
      %p75 = scmp.eq.s32.totalorder %s16, 1
      %p76 = scmp.ne.s32.totalorder %s71, %s73
      %p77 = scmp.eq.s32.totalorder %s16, 0
      %p78 = por %p76, %p77
      %p79 = scmp.ne.s32.totalorder %s71, %s73
      %p80 = scmp.eq.s32.totalorder %s21, 1
      %p81 = por %p79, %p80
      %p82 = scmp.ne.s32.totalorder %s73, %s74
      %p83 = scmp.eq.s32.totalorder %s21, 0
      %p84 = por %p82, %p83
      %p85 = scmp.ne.s32.totalorder %s73, %s74
      %p86 = scmp.eq.s32.totalorder %s22, 1
      %p87 = por %p85, %p86
      %p89 = scmp.ne.s32.totalorder %s74, %s88
      %p90 = scmp.eq.s32.totalorder %s22, 0
      %p91 = por %p89, %p90
      %s93 = sadd.s32 %s92, 1
      %p96 = scmp.eq.s32.totalorder %s16, 1
      %p97 = scmp.ne.s32.totalorder %s92, %s94
      %p98 = scmp.eq.s32.totalorder %s16, 0
      %p99 = por %p97, %p98
      %p100 = scmp.ne.s32.totalorder %s92, %s94
      %p101 = scmp.eq.s32.totalorder %s21, 1
      %p102 = por %p100, %p101
      %p103 = scmp.ne.s32.totalorder %s94, %s95
      %p104 = scmp.eq.s32.totalorder %s21, 0
      %p105 = por %p103, %p104
      %p106 = scmp.ne.s32.totalorder %s94, %s95
      %p107 = scmp.eq.s32.totalorder %s22, 1
      %p108 = por %p106, %p107
      %p110 = scmp.ne.s32.totalorder %s95, %s109
      %p111 = scmp.eq.s32.totalorder %s22, 0
      %p112 = por %p110, %p111
      %s114 = sadd.s32 %s113, 1
      %p117 = scmp.eq.s32.totalorder %s16, 1
      %p118 = scmp.ne.s32.totalorder %s113, %s115
      %p119 = scmp.eq.s32.totalorder %s16, 0
      %p120 = por %p118, %p119
      %p121 = scmp.ne.s32.totalorder %s113, %s115
      %p122 = scmp.eq.s32.totalorder %s21, 1
      %p123 = por %p121, %p122
      %p124 = scmp.ne.s32.totalorder %s115, %s116
      %p125 = scmp.eq.s32.totalorder %s21, 0
      %p126 = por %p124, %p125
      %p127 = scmp.ne.s32.totalorder %s115, %s116
      %p128 = scmp.eq.s32.totalorder %s22, 1
      %p129 = por %p127, %p128
      %p131 = scmp.ne.s32.totalorder %s116, %s130
      %p132 = scmp.eq.s32.totalorder %s22, 0
      %p133 = por %p131, %p132
      %s135 = sadd.s32 %s134, 1
      %p138 = scmp.eq.s32.totalorder %s16, 1
      %p139 = scmp.ne.s32.totalorder %s134, %s136
      %p140 = scmp.eq.s32.totalorder %s16, 0
      %p141 = por %p139, %p140
      %p142 = scmp.ne.s32.totalorder %s134, %s136
      %p143 = scmp.eq.s32.totalorder %s21, 1
      %p144 = por %p142, %p143
      %p145 = scmp.ne.s32.totalorder %s136, %s137
      %p146 = scmp.eq.s32.totalorder %s21, 0
      %p147 = por %p145, %p146
      %p148 = scmp.ne.s32.totalorder %s136, %s137
      %p149 = scmp.eq.s32.totalorder %s22, 1
      %p150 = por %p148, %p149
      %p152 = scmp.ne.s32.totalorder %s137, %s151
      %p153 = scmp.eq.s32.totalorder %s22, 0
      %p154 = por %p152, %p153
      %s156 = sadd.s32 %s155, 1
      %p159 = scmp.eq.s32.totalorder %s16, 1
      %p160 = scmp.ne.s32.totalorder %s155, %s157
      %p161 = scmp.eq.s32.totalorder %s16, 0
      %p162 = por %p160, %p161
      %p163 = scmp.ne.s32.totalorder %s155, %s157
      %p164 = scmp.eq.s32.totalorder %s21, 1
      %p165 = por %p163, %p164
      %p166 = scmp.ne.s32.totalorder %s157, %s158
      %p167 = scmp.eq.s32.totalorder %s21, 0
      %p168 = por %p166, %p167
      %p169 = scmp.ne.s32.totalorder %s157, %s158
      %p170 = scmp.eq.s32.totalorder %s22, 1
      %p171 = por %p169, %p170
      %p173 = scmp.ne.s32.totalorder %s158, %s172
      %p174 = scmp.eq.s32.totalorder %s22, 0
      %p175 = por %p173, %p174
      %s176 = ssub.s32 %s16, %s23
      %p177 = scmp.eq.s32.totalorder %s176, 0
      %s179 = sadd.s32 %s178, 1
      %s180 = scalar_select %p177, %s178, %s179
      %p183 = pneg %p177
      %p184 = scmp.eq.s32.totalorder %s16, 1
      %p185 = por %p183, %p184
      %p186 = scmp.ne.s32.totalorder %s178, %s181
      %p187 = scmp.eq.s32.totalorder %s16, 0
      %p188 = por %p186, %p187
      %p189 = scmp.ne.s32.totalorder %s178, %s181
      %p190 = scmp.eq.s32.totalorder %s21, 1
      %p191 = por %p189, %p190
      %p192 = scmp.ne.s32.totalorder %s181, %s182
      %p193 = scmp.eq.s32.totalorder %s21, 0
      %p194 = por %p192, %p193
      %p195 = scmp.ne.s32.totalorder %s181, %s182
      %p196 = scmp.eq.s32.totalorder %s22, 1
      %p197 = por %p195, %p196
      %p199 = scmp.ne.s32.totalorder %s182, %s198
      %p200 = scmp.eq.s32.totalorder %s22, 0
      %p201 = por %p199, %p200
      %p202 = scmp.le.s32.totalorder 1, %s16
      %p203 = scmp.lt.s32.totalorder %s16, 3
      %p204 = pnand %p202, %p203
      %p205 = pneg %p204
      // Predicated region
      $region9: #{tpu_custom_call.1} parent=5 // pred_check
        _
      $region10: #{tpu_custom_call.1} parent=5 // pred_check_branch
        %207 = sbr.rel (%p204) target = $region12
      $region11: #{tpu_custom_call.1} parent=5 // pred_region
        %s208 = ssub.s32 %s16, 1
        // Predicated region
        $region13: #{tpu_custom_call.1} parent=11 // pred_check
          %p209 = pneg %p63
        $region14: #{tpu_custom_call.1} parent=11 // pred_check_branch
          %211 = sbr.rel (%p209) target = $region16
        $region15: #{tpu_custom_call.1} parent=11 // pred_region
          _
        $region16: #{tpu_custom_call.1} parent=11 // pred_fallthru
          _
        // Predicated region
        $region17: #{tpu_custom_call.1} parent=11 // pred_check
          %p212 = pneg %p84
        $region18: #{tpu_custom_call.1} parent=11 // pred_check_branch
          %214 = sbr.rel (%p212) target = $region20
        $region19: #{tpu_custom_call.1} parent=11 // pred_region
          _
        $region20: #{tpu_custom_call.1} parent=11 // pred_fallthru
          _
        // Predicated region
        $region21: #{tpu_custom_call.1} parent=11 // pred_check
          %p215 = pneg %p105
        $region22: #{tpu_custom_call.1} parent=11 // pred_check_branch
          %217 = sbr.rel (%p215) target = $region24
        $region23: #{tpu_custom_call.1} parent=11 // pred_region
          _
        $region24: #{tpu_custom_call.1} parent=11 // pred_fallthru
          _
        // Predicated region
        $region25: #{tpu_custom_call.1} parent=11 // pred_check
          %p218 = pneg %p126
        $region26: #{tpu_custom_call.1} parent=11 // pred_check_branch
          %220 = sbr.rel (%p218) target = $region28
        $region27: #{tpu_custom_call.1} parent=11 // pred_region
          _
        $region28: #{tpu_custom_call.1} parent=11 // pred_fallthru
          _
        // Predicated region
        $region29: #{tpu_custom_call.1} parent=11 // pred_check
          %p221 = pneg %p147
        $region30: #{tpu_custom_call.1} parent=11 // pred_check_branch
          %223 = sbr.rel (%p221) target = $region32
        $region31: #{tpu_custom_call.1} parent=11 // pred_region
          _
        $region32: #{tpu_custom_call.1} parent=11 // pred_fallthru
          _
        // Predicated region
        $region33: #{tpu_custom_call.1} parent=11 // pred_check
          %p224 = pneg %p168
        $region34: #{tpu_custom_call.1} parent=11 // pred_check_branch
          %226 = sbr.rel (%p224) target = $region36
        $region35: #{tpu_custom_call.1} parent=11 // pred_region
          _
        $region36: #{tpu_custom_call.1} parent=11 // pred_fallthru
          _
      $region12: #{tpu_custom_call.1} parent=5 // pred_fallthru
        _
      %p227 = scmp.lt.s32.totalorder %s16, 2
      // Predicated region
      $region37: #{tpu_custom_call.1} parent=5 // pred_check
        %p228 = pneg %p227
      $region38: #{tpu_custom_call.1} parent=5 // pred_check_branch
        %230 = sbr.rel (%p228) target = $region40
      $region39: #{tpu_custom_call.1} parent=5 // pred_region
        // Predicated region
        $region41: #{tpu_custom_call.1} parent=39 // pred_check
          %p231 = pneg %p36
        $region42: #{tpu_custom_call.1} parent=39 // pred_check_branch
          %233 = sbr.rel (%p231) target = $region44
        $region43: #{tpu_custom_call.1} parent=39 // pred_region
          %p234 = scmp.lt.s32.totalorder %s16, 1
          %s235 = scalar_select %p234, %s16, 1
          %s236 = smul.addr %s235, 8
          %s237 = scalar_lea.vmem %s0, %s236
        $region44: #{tpu_custom_call.1} parent=39 // pred_fallthru
          _
      $region40: #{tpu_custom_call.1} parent=5 // pred_fallthru
        _
      %p238 = scmp.le.s32.totalorder 1, %s16
      %p239 = scmp.lt.s32.totalorder %s16, 3
      %p240 = pnand %p238, %p239
      %p241 = pneg %p240
      // Predicated region
      $region45: #{tpu_custom_call.1} parent=5 // pred_check
        _
      $region46: #{tpu_custom_call.1} parent=5 // pred_check_branch
        %243 = sbr.rel (%p240) target = $region48
      $region47: #{tpu_custom_call.1} parent=5 // pred_region
        %s244 = ssub.s32 %s16, 1
        %p245 = scmp.lt.s32.totalorder %s21, 1
        %s246 = scalar_select %p245, %s21, 1
        %s247 = smul.addr %s246, 8
        %s248 = scalar_lea.vmem %s0, %s247
        %p249 = pneg %p42
        %p250 = pneg %p39
        %p251 = pneg %p63
        %p252 = pneg %p60
        %p253 = pneg %p84
        %p254 = pneg %p81
        %p255 = pneg %p105
        %p256 = pneg %p102
        %p257 = pneg %p126
        %p258 = pneg %p123
        %p259 = pneg %p147
        %p260 = pneg %p144
        %p261 = pneg %p168
        %p262 = pneg %p165
        %p263 = pneg %p194
        %p264 = pneg %p191
        %s265 = sand.u32 %s181, 1
        %s266 = scalar_lea.sflag [#allocation3], %s265
        %s267 = sand.u32 %s181, 1
        %s268 = smul.addr %s267, 8
        %s269 = scalar_lea.vmem [#allocation2], %s268
        %p270 = scmp.lt.s32.totalorder %s21, 1
        %s271 = scalar_select %p270, %s21, 1
        %s272 = smul.addr %s271, 8
        %s273 = scalar_lea.vmem %s0, %s272
        %v274 = vld [vmem:[%s273] sm:$0xff]
        %vm275 = vcmask 261120
        %v276 = vsel %vm275, %v274, 0.0
        %277 = vadd.xlane.f32.xlu0 %v276
        %v278 = vpop.xlane.xlu0 %277
        %v279 = vrcp.pop 32.0
        %v280 = vmul.f32 %v278, %v279
        %v281 = vsub.f32 %v274, %v280
        %v282 = vmul.f32 %v281, %v281
        %v283 = vsel %vm275, %v282, 0.0
        %284 = vadd.xlane.f32.xlu0 %v283
        %v285 = vpop.xlane.xlu0 %284
        %v286 = vmul.f32 %v285, %v279
        %v287 = vadd.f32 %v286, 1e-05
        %v288 = vrsqrt.pop %v287
        %v289 = vmul.f32 %v281, %v288
        %v290 = vld [vmem:[%s1] sm:$0x1]
        %v292 = vlaneseq
        %v293 = vshrl.u32 %v292, 7
        %v294 = vsub.s32 0, %v293
        %v295 = vrot.slane %v290, %v294
        %v297 = vmul.f32 %v289, %v295
        %v298 = vld [vmem:[%s2] sm:$0x1]
        %v300 = vlaneseq
        %v301 = vshrl.u32 %v300, 7
        %v302 = vsub.s32 0, %v301
        %v303 = vrot.slane %v298, %v302
        %v305 = vadd.f32 %v297, %v303
        %v306 = vld [vmem:[%s3] sm:$0xff]
        %v307 = vld [vmem:[%s3 + $0x8] sm:$0xff]
        %v308 = vld [vmem:[%s3 + $0x10] sm:$0xff]
        %v309 = vld [vmem:[%s3 + $0x18] sm:$0xff]
        %v310 = vld [vmem:[%s4] sm:$0x1]
        %v312 = vlaneseq
        %v313 = vshrl.u32 %v312, 7
        %v314 = vsub.s32 0, %v313
        %v315 = vrot.slane %v310, %v314
        %v318 = vsel %vm275, %v305, 0
        %320 = vmatprep.subr.mxu0 0.0
        %321 = vmatpush1.msra.mxu0 0.0
        %322 = vmatprep.subr.mxu0 0.0
        %323 = vmatpush1.msra.mxu0 0.0
        %324 = vmatprep.subr.mxu0 0.0
        %325 = vmatpush1.msra.mxu0 0.0
        %326 = vmatprep.subr.mxu0 0.0
        %327 = vmatpush1.msra.mxu0 0.0
        %328 = vmatprep.subr.mxu0 0.0
        %329 = vmatpush1.msra.mxu0 0.0
        %330 = vmatprep.subr.mxu0 0.0
        %331 = vmatpush1.msra.mxu0 0.0
        %332 = vmatprep.subr.mxu0 0.0
        %333 = vmatpush1.msra.mxu0 0.0
        %334 = vmatprep.subr.mxu0 0.0
        %335 = vmatpush1.msra.mxu0 0.0
        %336 = vmatprep.subr.mxu0 0.0
        %337 = vmatpush1.msra.mxu0 0.0
        %338 = vmatprep.subr.mxu0 0.0
        %339 = vmatpush1.msra.mxu0 0.0
        %340 = vmatprep.subr.mxu0 0.0
        %341 = vmatpush1.msra.mxu0 0.0
        %342 = vmatprep.subr.mxu0 0.0
        %343 = vmatpush1.msra.mxu0 0.0
        %344 = vmatprep.subr.mxu0 0.0
        %345 = vmatpush1.msra.mxu0 %v309
        %346 = vmatprep.subr.mxu0 0.0
        %347 = vmatpush1.msra.mxu0 %v308
        %348 = vmatprep.subr.mxu0 0.0
        %349 = vmatpush1.msra.mxu0 %v307
        %350 = vmatprep.subr.mxu0 0.0
        %351 = vmatpush1.msra.mxu0 %v306
        %352 = vmatprep.subr.mxu0 0.0
        %353 = vmatpush2.msra.mxu0 0.0
        %354 = vmatprep.subr.mxu0 0.0
        %355 = vmatpush2.msra.mxu0 0.0
        %356 = vmatprep.subr.mxu0 0.0
        %357 = vmatpush2.msra.mxu0 0.0
        %358 = vmatprep.subr.mxu0 0.0
        %359 = vmatpush2.msra.mxu0 0.0
        %360 = vmatprep.subr.mxu0 0.0
        %361 = vmatpush2.msra.mxu0 0.0
        %362 = vmatprep.subr.mxu0 0.0
        %363 = vmatpush2.msra.mxu0 0.0
        %364 = vmatprep.subr.mxu0 0.0
        %365 = vmatpush2.msra.mxu0 0.0
        %366 = vmatprep.subr.mxu0 0.0
        %367 = vmatpush2.msra.mxu0 0.0
        %368 = vmatprep.subr.mxu0 0.0
        %369 = vmatpush2.msra.mxu0 0.0
        %370 = vmatprep.subr.mxu0 0.0
        %371 = vmatpush2.msra.mxu0 0.0
        %372 = vmatprep.subr.mxu0 0.0
        %373 = vmatpush2.msra.mxu0 0.0
        %374 = vmatprep.subr.mxu0 0.0
        %375 = vmatpush2.msra.mxu0 0.0
        %376 = vmatprep.subr.mxu0 0.0
        %377 = vmatpush2.msra.mxu0 0.0
        %378 = vmatprep.subr.mxu0 0.0
        %379 = vmatpush2.msra.mxu0 0.0
        %380 = vmatprep.subr.mxu0 0.0
        %381 = vmatpush2.msra.mxu0 0.0
        %382 = vmatprep.subr.mxu0 0.0
        %383 = vmatpush2.msra.mxu0 0.0
        %384 = vmatprep.mubr.f32.mxu0 0.0
        %385 = vmatmul.mubr.f32.gmra.mxu0 %v318
        %v386 = vpop.f32.mrf.mxu0
        %v387 = vadd.f32 %v315, %v386
        %v388 = vpop.f32.mrf.mxu0
        %389 = vdwg.mxu0
        %v390 = vmul.f32 %v387, 0.5
        %v391 = vmul.f32 %v387, 0.70710677
        %v392 = verf.f32.pop %v391
        %v393 = vadd.f32 %v392, 1.0
        %v394 = vmul.f32 %v390, %v393
        %v395 = vld [vmem:[%s5] sm:$0xff]
        %v396 = vld [vmem:[%s5 + $0x8] sm:$0xff]
        %v397 = vld [vmem:[%s5 + $0x10] sm:$0xff]
        %v398 = vld [vmem:[%s5 + $0x18] sm:$0xff]
        %v399 = vld [vmem:[%s5 + $0x20] sm:$0xff]
        %v400 = vld [vmem:[%s5 + $0x28] sm:$0xff]
        %v401 = vld [vmem:[%s5 + $0x30] sm:$0xff]
        %v402 = vld [vmem:[%s5 + $0x38] sm:$0xff]
        %v403 = vld [vmem:[%s5 + $0x40] sm:$0xff]
        %v404 = vld [vmem:[%s5 + $0x48] sm:$0xff]
        %v405 = vld [vmem:[%s5 + $0x50] sm:$0xff]
        %v406 = vld [vmem:[%s5 + $0x58] sm:$0xff]
        %v407 = vld [vmem:[%s5 + $0x60] sm:$0xff]
        %v408 = vld [vmem:[%s5 + $0x68] sm:$0xff]
        %v409 = vld [vmem:[%s5 + $0x70] sm:$0xff]
        %v410 = vld [vmem:[%s5 + $0x78] sm:$0xff]
        %v411 = vld [vmem:[%s6] sm:$0x1]
        %v413 = vlaneseq
        %v414 = vshrl.u32 %v413, 7
        %v415 = vsub.s32 0, %v414
        %v416 = vrot.slane %v411, %v415
        %418 = vmatprep.subr.mxu0 0.0
        %419 = vmatpush1.msra.mxu0 %v410
        %420 = vmatprep.subr.mxu0 0.0
        %421 = vmatpush1.msra.mxu0 %v409
        %422 = vmatprep.subr.mxu0 0.0
        %423 = vmatpush1.msra.mxu0 %v408
        %424 = vmatprep.subr.mxu0 0.0
        %425 = vmatpush1.msra.mxu0 %v407
        %426 = vmatprep.subr.mxu0 0.0
        %427 = vmatpush1.msra.mxu0 %v406
        %428 = vmatprep.subr.mxu0 0.0
        %429 = vmatpush1.msra.mxu0 %v405
        %430 = vmatprep.subr.mxu0 0.0
        %431 = vmatpush1.msra.mxu0 %v404
        %432 = vmatprep.subr.mxu0 0.0
        %433 = vmatpush1.msra.mxu0 %v403
        %434 = vmatprep.subr.mxu0 0.0
        %435 = vmatpush1.msra.mxu0 %v402
        %436 = vmatprep.subr.mxu0 0.0
        %437 = vmatpush1.msra.mxu0 %v401
        %438 = vmatprep.subr.mxu0 0.0
        %439 = vmatpush1.msra.mxu0 %v400
        %440 = vmatprep.subr.mxu0 0.0
        %441 = vmatpush1.msra.mxu0 %v399
        %442 = vmatprep.subr.mxu0 0.0
        %443 = vmatpush1.msra.mxu0 %v398
        %444 = vmatprep.subr.mxu0 0.0
        %445 = vmatpush1.msra.mxu0 %v397
        %446 = vmatprep.subr.mxu0 0.0
        %447 = vmatpush1.msra.mxu0 %v396
        %448 = vmatprep.subr.mxu0 0.0
        %449 = vmatpush1.msra.mxu0 %v395
        %450 = vmatprep.subr.mxu0 0.0
        %451 = vmatpush2.msra.mxu0 0.0
        %452 = vmatprep.subr.mxu0 0.0
        %453 = vmatpush2.msra.mxu0 0.0
        %454 = vmatprep.subr.mxu0 0.0
        %455 = vmatpush2.msra.mxu0 0.0
        %456 = vmatprep.subr.mxu0 0.0
        %457 = vmatpush2.msra.mxu0 0.0
        %458 = vmatprep.subr.mxu0 0.0
        %459 = vmatpush2.msra.mxu0 0.0
        %460 = vmatprep.subr.mxu0 0.0
        %461 = vmatpush2.msra.mxu0 0.0
        %462 = vmatprep.subr.mxu0 0.0
        %463 = vmatpush2.msra.mxu0 0.0
        %464 = vmatprep.subr.mxu0 0.0
        %465 = vmatpush2.msra.mxu0 0.0
        %466 = vmatprep.subr.mxu0 0.0
        %467 = vmatpush2.msra.mxu0 0.0
        %468 = vmatprep.subr.mxu0 0.0
        %469 = vmatpush2.msra.mxu0 0.0
        %470 = vmatprep.subr.mxu0 0.0
        %471 = vmatpush2.msra.mxu0 0.0
        %472 = vmatprep.subr.mxu0 0.0
        %473 = vmatpush2.msra.mxu0 0.0
        %474 = vmatprep.subr.mxu0 0.0
        %475 = vmatpush2.msra.mxu0 0.0
        %476 = vmatprep.subr.mxu0 0.0
        %477 = vmatpush2.msra.mxu0 0.0
        %478 = vmatprep.subr.mxu0 0.0
        %479 = vmatpush2.msra.mxu0 0.0
        %480 = vmatprep.subr.mxu0 0.0
        %481 = vmatpush2.msra.mxu0 0.0
        %482 = vmatprep.mubr.f32.mxu0 0.0
        %483 = vmatmul.mubr.f32.gmra.mxu0 %v394
        %v484 = vpop.f32.mrf.mxu0
        %v485 = vadd.f32 %v416, %v484
        %v486 = vpop.f32.mrf.mxu0
        %487 = vdwg.mxu0
        %vm488 = vcmask 523264
        %489 = vst.msk [vmem:[%s269] sm:$0xff] %vm488, %v485
        %s490 = sand.u32 %s181, 1
        %s491 = scalar_lea.sflag [#allocation3], %s490
        %s492 = sand.u32 %s181, 1
        %s493 = smul.addr %s492, 8
        %s494 = scalar_lea.vmem [#allocation2], %s493
        // Predicated region
        $region49: #{tpu_custom_call.1} parent=47 // pred_check
          %p495 = pneg %p191
        $region50: #{tpu_custom_call.1} parent=47 // pred_check_branch
          %497 = sbr.rel (%p495) target = $region52
        $region51: #{tpu_custom_call.1} parent=47 // pred_region
          %s499 = ssub.s32 128, 128
          %500 = vsyncadd %s491, %s499
          %s501 = smul.addr %s21, 128
          %s502 = scalar_lea.hbm %s7, %s501
          %s504 = sshll.u32 %s494, 4
          %s505 = int_to_ptr.vmem [resolvable:$true] %s504
          %507 = dma.vmem_to_hbm [thread:$0]  %s505, 128, %s502, %s491
        $region52: #{tpu_custom_call.1} parent=47 // pred_fallthru
          _
      $region48: #{tpu_custom_call.1} parent=5 // pred_fallthru
        _
      %p508 = scmp.le.s32.totalorder 2, %s16
      // Predicated region
      $region53: #{tpu_custom_call.1} parent=5 // pred_check
        %p509 = pneg %p508
      $region54: #{tpu_custom_call.1} parent=5 // pred_check_branch
        %511 = sbr.rel (%p509) target = $region56
      $region55: #{tpu_custom_call.1} parent=5 // pred_region
        %s512 = ssub.s32 %s16, 2
        // Predicated region
        $region57: #{tpu_custom_call.1} parent=55 // pred_check
          %p513 = pneg %p197
        $region58: #{tpu_custom_call.1} parent=55 // pred_check_branch
          %515 = sbr.rel (%p513) target = $region60
        $region59: #{tpu_custom_call.1} parent=55 // pred_region
          %s516 = sand.u32 %s182, 1
          %s517 = scalar_lea.sflag [#allocation3], %s516
          %s518 = sand.u32 %s182, 1
          %s519 = smul.addr %s518, 8
          %s520 = scalar_lea.vmem [#allocation2], %s519
          %521 = dma.done %s517, 128
        $region60: #{tpu_custom_call.1} parent=55 // pred_fallthru
          _
      $region56: #{tpu_custom_call.1} parent=5 // pred_fallthru
        _
    $region6: #{tpu_custom_call.1} parent=1 // loop_footer
      %s20 = sadd.s32 1, %s16
    $region7: #{tpu_custom_call.1} parent=1 // loop_footer_branch
      %15 = sbr.rel target = $region3
    $region8: #{tpu_custom_call.1} parent=1 // loop_exit
      _
    %522 = vsyncpa [#allocation3], 1
    %s523 = scalar_lea.sflag [#allocation3], 1
    %524 = vsyncpa %s523, 1

</llo_original>
